<compile_context>
chip_gen: v5e
topology: v5e:2x2
jax: 0.10.0
libtpu: 0.0.40
codegen_flags: <defaults>
</compile_context>

<pallas_src>
import functools

import jax
import jax.numpy as jnp
from jax.experimental import pallas as pl
from jax.experimental.pallas import tpu as pltpu

_LANE = 128
_SUBLANE = 8


def _round_up(x, m):
    return (x + m - 1) // m * m


# --------------------------------------------------------------------------- #
# Kernel
# --------------------------------------------------------------------------- #
def residual_kernel(x_ref, w_ref, scale_ref, shift_ref, out_ref, *, o_cols):
    x = x_ref[...]                                              # (tm, i_cols) f32
    # Linear (bias folded into shift): f32 MXU matmul, f32 accumulate.
    h = jnp.dot(x, w_ref[...], preferred_element_type=jnp.float32)
    # Eval-mode BatchNorm1d (per-feature scale/shift) + ReLU on the VPU.
    y = jnp.maximum(h * scale_ref[...] + shift_ref[...], 0.0)
    # torch.cat([out, input], dim=1): both stores are lane-aligned (o_cols % 128 == 0).
    out_ref[:, :o_cols] = y
    out_ref[:, o_cols:] = x


def _residual_pallas(x, w, scale, shift, *, tm):
    """x: (m, i_cols), w: (i_cols, o_cols); m % tm == 0, i_cols/o_cols % 128 == 0."""
    m, i_cols = x.shape
    o_cols = w.shape[1]
    n_out = o_cols + i_cols

    kernel = functools.partial(residual_kernel, o_cols=o_cols)

    cost = pl.CostEstimate(
        flops=2 * m * i_cols * o_cols,
        transcendentals=0,
        bytes_accessed=(m * i_cols * 4            # x read
                        + i_cols * o_cols * 4     # W read
                        + 2 * o_cols * 4          # scale/shift read
                        + m * n_out * 4),         # output write
    )

    return pl.pallas_call(
        kernel,
        out_shape=jax.ShapeDtypeStruct((m, n_out), jnp.float32),
        grid=(m // tm,),
        in_specs=[
            # x tile: pipelined (double-buffered) across row tiles.
            pl.BlockSpec((tm, i_cols), lambda r: (r, 0)),
            # Resident operands: constant index map + single buffer (halves
            # their VMEM footprint; headroom goes to bigger x/out tiles).
            pl.BlockSpec((i_cols, o_cols), lambda r: (0, 0),
                         pipeline_mode=pl.Buffered(1)),
            pl.BlockSpec((1, o_cols), lambda r: (0, 0),
                         pipeline_mode=pl.Buffered(1)),
            pl.BlockSpec((1, o_cols), lambda r: (0, 0),
                         pipeline_mode=pl.Buffered(1)),
        ],
        out_specs=pl.BlockSpec((tm, n_out), lambda r: (r, 0)),
        compiler_params=pltpu.CompilerParams(
            dimension_semantics=("parallel",)),
        cost_estimate=cost,
    )(x, w, scale, shift)


# --------------------------------------------------------------------------- #
# One-time parameter preparation (hoisted out of the hot path)
# --------------------------------------------------------------------------- #
def prepare_residual_params(params, *, eps=1e-5):
    """Fold Linear bias + eval-mode BN into per-feature scale/shift and pad the
    feature dims to 128 lanes.  Call once; reuse the result for every forward."""
    w = params["w"].astype(jnp.float32)                     # (i, o), pre-transposed
    b, gamma, beta = params["b"], params["gamma"], params["beta"]
    mean, var = params["running_mean"], params["running_var"]
    i, o = w.shape

    #   y = (x@W + b - mean) * gamma / sqrt(var + eps) + beta = (x@W)*scale + shift
    scale = gamma * jax.lax.rsqrt(var + eps)                # (1, o)
    shift = (b - mean) * scale + beta                       # (1, o)

    i_pad = _round_up(i, _LANE)
    o_pad = _round_up(o, _LANE)
    if i_pad == i and o_pad == o:
        w_p, scale_p, shift_p = w, scale, shift
    else:
        w_p = jnp.zeros((i_pad, o_pad), jnp.float32).at[:i, :o].set(w)
        scale_p = jnp.zeros((1, o_pad), jnp.float32).at[:, :o].set(scale)
        shift_p = jnp.zeros((1, o_pad), jnp.float32).at[:, :o].set(shift)

    return dict(w=w_p, scale=scale_p, shift=shift_p,
                i=i, o=o, i_pad=i_pad, o_pad=o_pad)


# --------------------------------------------------------------------------- #
# Forward (hot path)
# --------------------------------------------------------------------------- #
def _pick_tm_aligned(m, cap):
    """Largest multiple-of-8 tile that divides m and is <= cap, preferring a
    tile that yields >= 2 grid steps (v7x megacore sharding)."""
    cap = max(_SUBLANE, (cap // _SUBLANE) * _SUBLANE)
    divs = [t for t in range(_SUBLANE, min(cap, m) + 1, _SUBLANE) if m % t == 0]
    two_step = [t for t in divs if m // t >= 2]
    return two_step[-1] if two_step else divs[-1]


def residual_forward(x, prepped, *, tm=512):
    """x: (B, i) float32.  prepped: output of prepare_residual_params.

    tm guidance: 512-1024 on v5e/v6e (128 MiB VMEM), ~512 on v7x (keep
    2*tm*i_pad*4 + 2*tm*(o_pad+i_pad)*4 + W under ~32 MiB scoped VMEM)."""
    B, i = x.shape
    assert i == prepped["i"], (i, prepped["i"])
    o, i_pad, o_pad = prepped["o"], prepped["i_pad"], prepped["o_pad"]
    w, scale, shift = prepped["w"], prepped["scale"], prepped["shift"]

    tm = max(_SUBLANE, (tm // _SUBLANE) * _SUBLANE)  # defensive multiple-of-8

    aligned = (i == i_pad) and (o == o_pad) and (B % _SUBLANE == 0)
    if aligned:
        # Fast path: no padding, no final concat — the kernel slab already is
        # torch.cat([relu(bn(fc(x))), x], dim=1).
        tm_a = _pick_tm_aligned(B, tm)
        return _residual_pallas(x, w, scale, shift, tm=tm_a)

    # General path: pad rows to the tile and features to 128 lanes; size the
    # tile so the row grid has >= 2 steps whenever B allows.
    m8 = _round_up(B, _SUBLANE)
    tm_p = min(tm, max(_SUBLANE, _round_up(pl.cdiv(m8, 2), _SUBLANE)))
    m_pad = _round_up(B, tm_p)

    x_pad = jnp.zeros((m_pad, i_pad), jnp.float32).at[:B, :i].set(x)
    out_pad = _residual_pallas(x_pad, w, scale, shift, tm=tm_p)

    # Columns [0, o) hold relu(bn(fc(x))); [o_pad, o_pad + i) hold x.
    return jnp.concatenate(
        [out_pad[:B, :o], out_pad[:B, o_pad:o_pad + i]], axis=1)


# --------------------------------------------------------------------------- #
# Reference + test harness
# --------------------------------------------------------------------------- #
def init_params(key, i, o):
    """Torch-like Linear init (uniform +/- 1/sqrt(fan_in)), weight stored
    pre-transposed as (in, out); non-trivial BN stats so BN is exercised."""
    kw, kb, kg, kbeta, km, kv = jax.random.split(key, 6)
    bound = 1.0 / jnp.sqrt(i)
    w = jax.random.uniform(kw, (i, o), minval=-bound, maxval=bound,
                           dtype=jnp.float32)
    b = jax.random.uniform(kb, (1, o), minval=-bound, maxval=bound,
                           dtype=jnp.float32)
    gamma = 1.0 + 0.1 * jax.random.normal(kg, (1, o), dtype=jnp.float32)
    beta = 0.1 * jax.random.normal(kbeta, (1, o), dtype=jnp.float32)
    running_mean = 0.1 * jax.random.normal(km, (1, o), dtype=jnp.float32)
    running_var = jax.random.uniform(kv, (1, o), minval=0.5, maxval=1.5,
                                     dtype=jnp.float32)
    return dict(w=w, b=b, gamma=gamma, beta=beta,
                running_mean=running_mean, running_var=running_var)


def reference_forward(x, params, *, eps=1e-5):
    """Pure-JAX f32 reference (matches PyTorch eval-mode Residual)."""
    h = jnp.dot(x, params["w"], preferred_element_type=jnp.float32,
                precision=jax.lax.Precision.HIGHEST) + params["b"]
    y = ((h - params["running_mean"])
         * jax.lax.rsqrt(params["running_var"] + eps)
         * params["gamma"] + params["beta"])
    y = jnp.maximum(y, 0.0)
    return jnp.concatenate([y, x], axis=1)


if __name__ == "__main__":
    key = jax.random.PRNGKey(0)

    # Case 1: small, unaligned dims -> padded path.   Residual(32, 64),  B=8.
    # Case 2: CTGAN-like aligned dims -> fast path.   Residual(128, 128), B=16
    #         (also exercises a multi-step row grid).
    cases = [(8, 32, 64), (16, 128, 128)]

    ok = True
    for (batch, in_features, out_features) in cases:
        key, kx, kp = jax.random.split(key, 3)
        x = jax.random.normal(kx, (batch, in_features), dtype=jnp.float32)
        raw_params = init_params(kp, in_features, out_features)

        prepped = prepare_residual_params(raw_params)          # one-time setup
        out = jax.block_until_ready(residual_forward(x, prepped))
        ref = reference_forward(x, raw_params)

        assert out.shape == (batch, out_features + in_features), out.shape
        assert jnp.allclose(out, ref, atol=5e-3, rtol=5e-3), (
            f"mismatch for case {(batch, in_features, out_features)}: "
            f"max abs err {jnp.max(jnp.abs(out - ref))}")
        ok = ok and bool(jnp.all(jnp.isfinite(out)))

    assert ok
    print("KERNEL_OK")
</pallas_src>

<mosaic_0001>
module attributes {stable_mosaic.version = 11 : i64} {
  func.func @residual_kernel(%arg0: i32, %arg1: memref<8x128xf32, #tpu.memory_space<vmem>>, %arg2: memref<128x128xf32, #tpu.memory_space<vmem>>, %arg3: memref<1x128xf32, #tpu.memory_space<vmem>>, %arg4: memref<1x128xf32, #tpu.memory_space<vmem>>, %arg5: memref<8x256xf32, #tpu.memory_space<vmem>>) attributes {dimension_semantics = [#tpu.dimension_semantics<parallel>], iteration_bounds = array<i64: 1>, scalar_prefetch = 0 : i64, scratch_operands = 0 : i64, tpu.core_type = #tpu.core_type<tc>, window_params = [{transform_indices = @transform_0, window_bounds = array<i64: 8, 128>}, {pipeline_mode = #tpu.pipeline_mode<synchronous>, transform_indices = @transform_1, window_bounds = array<i64: 128, 128>}, {pipeline_mode = #tpu.pipeline_mode<synchronous>, transform_indices = @transform_2, window_bounds = array<i64: 1, 128>}, {pipeline_mode = #tpu.pipeline_mode<synchronous>, transform_indices = @transform_3, window_bounds = array<i64: 1, 128>}, {transform_indices = @transform_4, window_bounds = array<i64: 8, 256>}]} {
    %c0 = arith.constant 0 : index
    %c0_0 = arith.constant 0 : index
    %0 = vector.load %arg1[%c0, %c0_0] : memref<8x128xf32, #tpu.memory_space<vmem>>, vector<8x128xf32>
    %c0_1 = arith.constant 0 : index
    %c0_2 = arith.constant 0 : index
    %1 = vector.load %arg2[%c0_1, %c0_2] : memref<128x128xf32, #tpu.memory_space<vmem>>, vector<128x128xf32>
    %cst = arith.constant dense<0.000000e+00> : vector<8x128xf32>
    %2 = tpu.matmul %0, %1, %cst {dimension_numbers = #tpu.dot_dimension_numbers<[1], [0], [0], [1], [0, 0, 1, 1], [], []>} : vector<8x128xf32>, vector<128x128xf32>, vector<8x128xf32> -> vector<8x128xf32>
    %c0_3 = arith.constant 0 : index
    %c0_4 = arith.constant 0 : index
    %3 = vector.load %arg3[%c0_3, %c0_4] : memref<1x128xf32, #tpu.memory_space<vmem>>, vector<1x128xf32>
    %4 = vector.broadcast %3 : vector<1x128xf32> to vector<8x128xf32>
    %5 = arith.mulf %2, %4 : vector<8x128xf32>
    %c0_5 = arith.constant 0 : index
    %c0_6 = arith.constant 0 : index
    %6 = vector.load %arg4[%c0_5, %c0_6] : memref<1x128xf32, #tpu.memory_space<vmem>>, vector<1x128xf32>
    %7 = vector.broadcast %6 : vector<1x128xf32> to vector<8x128xf32>
    %8 = arith.addf %5, %7 : vector<8x128xf32>
    %cst_7 = arith.constant 0.000000e+00 : f32
    %9 = vector.broadcast %cst_7 : f32 to vector<8x128xf32>
    %10 = arith.maximumf %8, %9 : vector<8x128xf32>
    %c0_8 = arith.constant 0 : index
    %c0_9 = arith.constant 0 : index
    %11 = vector.load %arg5[%c0_8, %c0_9] : memref<8x256xf32, #tpu.memory_space<vmem>>, vector<8x128xf32>
    tpu.vector_store %arg5[%c0_8, %c0_9], %10 {strides = array<i32>} : memref<8x256xf32, #tpu.memory_space<vmem>>, vector<8x128xf32>,
    %c0_10 = arith.constant 0 : index
    %c128 = arith.constant 128 : index
    %12 = vector.load %arg5[%c0_10, %c128] : memref<8x256xf32, #tpu.memory_space<vmem>>, vector<8x128xf32>
    tpu.vector_store %arg5[%c0_10, %c128], %0 {strides = array<i32>} : memref<8x256xf32, #tpu.memory_space<vmem>>, vector<8x128xf32>,
    return
  }
  func.func @transform_0(%arg0: i32) -> (i32, i32) {
    %c0_i32 = arith.constant 0 : i32
    %c0_i32_0 = arith.constant 0 : i32
    return %arg0, %c0_i32 : i32, i32
  }
  func.func @transform_1(%arg0: i32) -> (i32, i32) {
    %c0_i32 = arith.constant 0 : i32
    %c0_i32_0 = arith.constant 0 : i32
    %c0_i32_1 = arith.constant 0 : i32
    return %c0_i32, %c0_i32_0 : i32, i32
  }
  func.func @transform_2(%arg0: i32) -> (i32, i32) {
    %c0_i32 = arith.constant 0 : i32
    %c0_i32_0 = arith.constant 0 : i32
    %c0_i32_1 = arith.constant 0 : i32
    return %c0_i32, %c0_i32_0 : i32, i32
  }
  func.func @transform_3(%arg0: i32) -> (i32, i32) {
    %c0_i32 = arith.constant 0 : i32
    %c0_i32_0 = arith.constant 0 : i32
    %c0_i32_1 = arith.constant 0 : i32
    return %c0_i32, %c0_i32_0 : i32, i32
  }
  func.func @transform_4(%arg0: i32) -> (i32, i32) {
    %c0_i32 = arith.constant 0 : i32
    %c0_i32_0 = arith.constant 0 : i32
    return %arg0, %c0_i32 : i32, i32
  }
}

</mosaic_0001>

<llo_original>
// kernel: tpu_custom_call.1
$region0: #{tpu_custom_call.1}
  #allocation0 [shape = 'u32[]', space=smem, size = 0x4, offset = 0x4, fixed_abs, tag = 'smem constant byte address 0x4 - core index']
  #allocation1 [shape = 'u32[72,128]{1,0:T(1,128)}', space=vmem, size = 0x9000, scoped, tag = 'internal scratch']
  %s0 = inlined_call_operand.hbm [shape: f32[8,128], index: 0, kind: input, shape index: {}]
  %s1 = inlined_call_operand.hbm [shape: f32[128,128], index: 1, kind: input, shape index: {}]
  %s2 = inlined_call_operand.vmem [shape: f32[1,128], index: 2, kind: input, shape index: {}]
  %s3 = inlined_call_operand.vmem [shape: f32[1,128], index: 3, kind: input, shape index: {}]
  %s4 = inlined_call_operand.hbm [shape: f32[8,256], index: 4, kind: output, shape index: {}]
  %s5 = sld [smem:[#allocation0]]
  $region34: #{tpu_custom_call.1} parent=0
    _
  %s7 = ssub.s32 1, %s5
  %s8 = scalar_select 0, %s7, %s5
  $region1: #{tpu_custom_call.1} parent=0
    #allocation2 [shape = 'u8[4096]{0}', space=vmem, size = 0x1000, scoped, tag = 'input window, operand 0, single buffered']
    #allocation3 [shape = 's32[1]{0}', space=sflag, size = 0x4, scoped, tag = 'scoped memory for tpu_custom_call.1']
    #allocation4 [shape = 's32[1]{0}', space=sflag, size = 0x4, scoped, tag = 'scoped memory for tpu_custom_call.1']
    #allocation5 [shape = 'u8[65536]{0}', space=vmem, size = 0x10000, scoped, tag = 'input window, operand 1, single buffered']
    #allocation6 [shape = 's32[1]{0}', space=sflag, size = 0x4, scoped, tag = 'scoped memory for tpu_custom_call.1']
    #allocation7 [shape = 'u8[8192]{0}', space=vmem, size = 0x2000, scoped, tag = 'output window, operand 0, single buffered']
    %9 = vsyncpa [#allocation3], 0
    %10 = vsyncpa [#allocation6], 0
    %11 = vsyncpa [#allocation4], 0
    // Predicated region
    $region2: #{tpu_custom_call.1} parent=1 // pred_check
      _
    $region3: #{tpu_custom_call.1} parent=1 // pred_check_branch
      %13 = sbr.rel (0) target = $region5
    $region4: #{tpu_custom_call.1} parent=1 // pred_region
      %15 = vsyncadd [#allocation3], 0
      %s17 = sshll.u32 %s0, 4
      %s18 = int_to_ptr.hbm [resolvable:$true] %s17
      %s19 = sshll.u32 [#allocation2], 4
      %s20 = int_to_ptr.vmem [resolvable:$true] %s19
      %22 = dma.hbm_to_vmem [thread:$0]  %s18, 128, %s20, [#allocation3]
    $region5: #{tpu_custom_call.1} parent=1 // pred_fallthru
      _
    // Predicated region
    $region6: #{tpu_custom_call.1} parent=1 // pred_check
      _
    $region7: #{tpu_custom_call.1} parent=1 // pred_check_branch
      %24 = sbr.rel (0) target = $region9
    $region8: #{tpu_custom_call.1} parent=1 // pred_region
      %26 = vsyncadd [#allocation6], 0
      %s27 = sshll.u32 %s1, 4
      %s28 = int_to_ptr.hbm [resolvable:$true] %s27
      %s29 = sshll.u32 [#allocation5], 4
      %s30 = int_to_ptr.vmem [resolvable:$true] %s29
      %35 = dma.hbm_to_vmem [thread:$0]  %s28, 2048, %s30, [#allocation6], 128, 128, 8
    $region9: #{tpu_custom_call.1} parent=1 // pred_fallthru
      _
    // Predicated region
    $region10: #{tpu_custom_call.1} parent=1 // pred_check
      _
    $region11: #{tpu_custom_call.1} parent=1 // pred_check_branch
      %37 = sbr.rel (0) target = $region13
    $region12: #{tpu_custom_call.1} parent=1 // pred_region
      _
    $region13: #{tpu_custom_call.1} parent=1 // pred_fallthru
      _
    // Predicated region
    $region14: #{tpu_custom_call.1} parent=1 // pred_check
      _
    $region15: #{tpu_custom_call.1} parent=1 // pred_check_branch
      %39 = sbr.rel (0) target = $region17
    $region16: #{tpu_custom_call.1} parent=1 // pred_region
      _
    $region17: #{tpu_custom_call.1} parent=1 // pred_fallthru
      _
    // Predicated region
    $region18: #{tpu_custom_call.1} parent=1 // pred_check
      _
    $region19: #{tpu_custom_call.1} parent=1 // pred_check_branch
      %41 = sbr.rel (0) target = $region21
    $region20: #{tpu_custom_call.1} parent=1 // pred_region
      %43 = dma.done [#allocation3], 128
    $region21: #{tpu_custom_call.1} parent=1 // pred_fallthru
      _
    // Predicated region
    $region22: #{tpu_custom_call.1} parent=1 // pred_check
      _
    $region23: #{tpu_custom_call.1} parent=1 // pred_check_branch
      %45 = sbr.rel (0) target = $region25
    $region24: #{tpu_custom_call.1} parent=1 // pred_region
      %47 = dma.done [#allocation6], 2048
    $region25: #{tpu_custom_call.1} parent=1 // pred_fallthru
      _
    %v48 = vld [vmem:[#allocation2] sm:$0xff]
    %v49 = vld [vmem:[#allocation5] sm:$0xff]
    %v50 = vld [vmem:[#allocation5 + $0x8] sm:$0xff]
    %v51 = vld [vmem:[#allocation5 + $0x10] sm:$0xff]
    %v52 = vld [vmem:[#allocation5 + $0x18] sm:$0xff]
    %v53 = vld [vmem:[#allocation5 + $0x20] sm:$0xff]
    %v54 = vld [vmem:[#allocation5 + $0x28] sm:$0xff]
    %v55 = vld [vmem:[#allocation5 + $0x30] sm:$0xff]
    %v56 = vld [vmem:[#allocation5 + $0x38] sm:$0xff]
    %v57 = vld [vmem:[#allocation5 + $0x40] sm:$0xff]
    %v58 = vld [vmem:[#allocation5 + $0x48] sm:$0xff]
    %v59 = vld [vmem:[#allocation5 + $0x50] sm:$0xff]
    %v60 = vld [vmem:[#allocation5 + $0x58] sm:$0xff]
    %v61 = vld [vmem:[#allocation5 + $0x60] sm:$0xff]
    %v62 = vld [vmem:[#allocation5 + $0x68] sm:$0xff]
    %v63 = vld [vmem:[#allocation5 + $0x70] sm:$0xff]
    %v64 = vld [vmem:[#allocation5 + $0x78] sm:$0xff]
    %65 = vmatpush.msra.mxu0 %v64
    %66 = vmatpush.msra.mxu0 %v63
    %67 = vmatpush.msra.mxu0 %v62
    %68 = vmatpush.msra.mxu0 %v61
    %69 = vmatpush.msra.mxu0 %v60
    %70 = vmatpush.msra.mxu0 %v59
    %71 = vmatpush.msra.mxu0 %v58
    %72 = vmatpush.msra.mxu0 %v57
    %73 = vmatpush.msra.mxu0 %v56
    %74 = vmatpush.msra.mxu0 %v55
    %75 = vmatpush.msra.mxu0 %v54
    %76 = vmatpush.msra.mxu0 %v53
    %77 = vmatpush.msra.mxu0 %v52
    %78 = vmatpush.msra.mxu0 %v51
    %79 = vmatpush.msra.mxu0 %v50
    %80 = vmatpush.msra.mxu0 %v49
    %81 = vmatmul.f32.gmra.mxu0 %v48
    %v82 = vpop.f32.mrf.mxu0
    %v83 = vadd.f32 0.0, %v82
    %84 = vdwg.mxu0
    %v85 = vld [vmem:[%s2] sm:$0x1]
    %v87 = vperm.slane %v85, 0
    %v89 = vmul.f32 %v83, %v87
    %v90 = vld [vmem:[%s3] sm:$0x1]
    %v92 = vperm.slane %v90, 0
    %v94 = vadd.f32 %v89, %v92
    %v95 = vmax.f32 %v94, 0.0
    %96 = vst [vmem:[#allocation7] sm:$0xff] %v95
    %97 = vst [vmem:[#allocation7 + $0x8] sm:$0xff] %v48
    // Predicated region
    $region26: #{tpu_custom_call.1} parent=1 // pred_check
      _
    $region27: #{tpu_custom_call.1} parent=1 // pred_check_branch
      %99 = sbr.rel (0) target = $region29
    $region28: #{tpu_custom_call.1} parent=1 // pred_region
      %101 = vsyncadd [#allocation4], 0
      %s103 = sshll.u32 [#allocation7], 4
      %s104 = int_to_ptr.vmem [resolvable:$true] %s103
      %s105 = sshll.u32 %s4, 4
      %s106 = int_to_ptr.hbm [resolvable:$true] %s105
      %108 = dma.vmem_to_hbm [thread:$0]  %s104, 256, %s106, [#allocation4]
    $region29: #{tpu_custom_call.1} parent=1 // pred_fallthru
      _
    // Predicated region
    $region30: #{tpu_custom_call.1} parent=1 // pred_check
      _
    $region31: #{tpu_custom_call.1} parent=1 // pred_check_branch
      %110 = sbr.rel (0) target = $region33
    $region32: #{tpu_custom_call.1} parent=1 // pred_region
      %112 = dma.done [#allocation4], 256
    $region33: #{tpu_custom_call.1} parent=1 // pred_fallthru
      _
    %113 = vsyncpa [#allocation3], 1
    %114 = vsyncpa [#allocation6], 1
    %115 = vsyncpa [#allocation4], 1

</llo_original>
